<compile_context>
chip_gen: v5e
topology: v5e:2x2
jax: 0.10.0
libtpu: 0.0.40
codegen_flags: <defaults>
</compile_context>

<pallas_src>
import jax
import jax.numpy as jnp
from jax.experimental import pallas as pl
from jax.experimental.pallas import tpu as pltpu

N_NODES = 118  # fixed by the module: trans = ones((118, 1))


def pool_kernel(ef_ref, out_ref):
    # ef_ref: (TB, N, F)   out_ref: (TB, N, 2F)
    x = ef_ref[...]
    tb, n, f = x.shape

    # Mean over the node axis (torch dim=-2, keepdim).  Accumulate in f32 (safe
    # for bf16 inputs over the 118-term sum), scale by 1/N, cast once at the
    # small (TB, 1, F) size.
    mean = (jnp.sum(x, axis=1, dtype=jnp.float32, keepdims=True)
            * jnp.float32(1.0 / n)).astype(out_ref.dtype)            # (TB, 1, F)
    pooled = jnp.broadcast_to(mean, (tb, n, f))                      # VPU broadcast
    x_out = x.astype(out_ref.dtype)

    if 2 * f <= 128:
        # Both halves live inside one (sublane, 128) lane tile anyway: a single
        # concatenated store is the cheap, robust path.
        out_ref[...] = jnp.concatenate([x_out, pooled], axis=-1)
    else:
        # Two slab stores; avoids materializing/relayouting the (TB, N, 2F)
        # concat through the XLU.  When F % 128 == 0 both stores are unmasked.
        out_ref[:, :, :f] = x_out
        out_ref[:, :, f:] = pooled


def _num_tensorcores():
    # Megacore parts (2 TensorCores sharded via dimension_semantics) need >=2
    # grid tiles per core so input/output DMAs stay double-buffered.
    try:
        kind = jax.devices()[0].device_kind.lower()
    except Exception:
        return 1
    return 2 if any(t in kind for t in ("v4", "v5p", "v7")) else 1


def _vmem_config():
    # Scoped-VMEM limit and per-pipeline tile budget per generation:
    # v7x has 64 MiB per TensorCore, v5e/v6e have 128 MiB.
    try:
        cap = getattr(pltpu.get_tpu_info(), "vmem_capacity_bytes", 128 << 20)
    except Exception:
        cap = 128 << 20
    limit = min(max(cap // 2, 16 << 20), 64 << 20)
    budget = limit // 2  # leave headroom for compiler-internal scratch
    return limit, budget


def _pick_batch_tile(B, N, F, itemsize, budget_bytes):
    # Padded VMEM footprint: last two dims round up to (sublane, 128) where
    # sublane = 8 (4-byte) / 16 (2-byte) / 32 (1-byte) dtypes.
    sublane = 8 * max(1, 4 // itemsize)

    def padded(rows, cols, isz):
        return (pl.cdiv(rows, sublane) * sublane) * (pl.cdiv(cols, 128) * 128) * isz

    # Double-buffered input tile + double-buffered output tile + f32 working set.
    per_batch = (2 * padded(N, F, itemsize)
                 + 2 * padded(N, 2 * F, itemsize)
                 + padded(N, F, 4))
    tb = max(1, min(B, budget_bytes // per_batch))

    # Keep enough grid tiles for per-core pipelining / megacore sharding, but
    # never shrink below that just for parallelism.
    min_tiles = 2 * _num_tensorcores()
    if B >= min_tiles:
        tb = min(tb, pl.cdiv(B, min_tiles))
    return tb


def pool_layer(ef):
    # Accept (..., 118, F) like the PyTorch module; flatten leading dims (free).
    assert ef.ndim >= 2 and ef.shape[-2] == N_NODES, \
        "PoolLayer requires 118 nodes on dim -2"
    lead = ef.shape[:-2]
    F = ef.shape[-1]
    B = 1
    for d in lead:
        B *= int(d)
    ef3 = ef.reshape(B, N_NODES, F)

    itemsize = jnp.dtype(ef.dtype).itemsize
    vmem_limit, budget = _vmem_config()
    tb = _pick_batch_tile(B, N_NODES, F, itemsize, budget)
    grid = (pl.cdiv(B, tb),)

    # NOTE: for very small F the output's trailing dim (2F) is lane-sparse; a
    # fully lane-dense store would need either an in-kernel relayout or an
    # extra XLA transpose pass, so the logical (B, 118, 2F) layout is kept.
    out = pl.pallas_call(
        pool_kernel,
        out_shape=jax.ShapeDtypeStruct((B, N_NODES, 2 * F), ef.dtype),
        grid=grid,
        in_specs=[pl.BlockSpec((tb, N_NODES, F), lambda b: (b, 0, 0))],
        out_specs=pl.BlockSpec((tb, N_NODES, 2 * F), lambda b: (b, 0, 0)),
        compiler_params=pltpu.CompilerParams(
            dimension_semantics=("parallel",),
            vmem_limit_bytes=vmem_limit,
        ),
    )(ef3)
    return out.reshape(*lead, N_NODES, 2 * F)


def pool_layer_ref(ef):
    # Pure-JAX reference mirroring the PyTorch module exactly (incl. ones matmul).
    trans = jnp.ones((N_NODES, 1), dtype=ef.dtype)
    ef_pool = jnp.mean(ef, axis=-2, keepdims=True)   # (B, 1, F)
    ef_pool = jnp.matmul(trans, ef_pool)             # (B, 118, F)
    return jnp.concatenate((ef, ef_pool), axis=-1)   # (B, 118, 2F)


if __name__ == "__main__":
    key = jax.random.PRNGKey(0)
    B, F = 6, 8
    ef = jax.random.normal(key, (B, N_NODES, F), dtype=jnp.float32)

    out = jax.block_until_ready(pool_layer(ef))
    ref = pool_layer_ref(ef)

    assert out.shape == (B, N_NODES, 2 * F), out.shape
    assert jnp.allclose(out, ref, atol=1e-5, rtol=1e-5), "mismatch vs reference"
    print("KERNEL_OK")
</pallas_src>

<mosaic_0001>
module attributes {stable_mosaic.version = 11 : i64} {
  func.func @pool_kernel(%arg0: i32, %arg1: memref<3x118x8xf32, #tpu.memory_space<vmem>>, %arg2: memref<3x118x16xf32, #tpu.memory_space<vmem>>) attributes {dimension_semantics = [#tpu.dimension_semantics<parallel>], iteration_bounds = array<i64: 2>, scalar_prefetch = 0 : i64, scratch_operands = 0 : i64, tpu.core_type = #tpu.core_type<tc>, window_params = [{transform_indices = @transform_0, window_bounds = array<i64: 3, 118, 8>}, {transform_indices = @transform_1, window_bounds = array<i64: 3, 118, 16>}]} {
    %c0 = arith.constant 0 : index
    %c0_0 = arith.constant 0 : index
    %c0_1 = arith.constant 0 : index
    %0 = vector.load %arg1[%c0, %c0_0, %c0_1] : memref<3x118x8xf32, #tpu.memory_space<vmem>>, vector<3x118x8xf32>
    %cst = arith.constant dense<0.000000e+00> : vector<3x8xf32>
    %1 = vector.multi_reduction <add>, %0, %cst [1] : vector<3x118x8xf32> to vector<3x8xf32>
    %2 = vector.shape_cast %1 : vector<3x8xf32> to vector<3x1x8xf32>
    %cst_2 = arith.constant 0.00847457629 : f32
    %3 = vector.broadcast %cst_2 : f32 to vector<3x1x8xf32>
    %4 = arith.mulf %2, %3 : vector<3x1x8xf32>
    %5 = vector.shape_cast %4 : vector<3x1x8xf32> to vector<3x1x8xf32>
    %6 = vector.broadcast %5 : vector<3x1x8xf32> to vector<3x118x8xf32>
    %7 = tpu.concatenate %0, %6 in 2 : vector<3x118x8xf32>, vector<3x118x8xf32> -> vector<3x118x16xf32>
    %c0_3 = arith.constant 0 : index
    %c0_4 = arith.constant 0 : index
    %c0_5 = arith.constant 0 : index
    %8 = vector.load %arg2[%c0_3, %c0_4, %c0_5] : memref<3x118x16xf32, #tpu.memory_space<vmem>>, vector<3x118x16xf32>
    tpu.vector_store %arg2[%c0_3, %c0_4, %c0_5], %7 {strides = array<i32>} : memref<3x118x16xf32, #tpu.memory_space<vmem>>, vector<3x118x16xf32>,
    return
  }
  func.func @transform_0(%arg0: i32) -> (i32, i32, i32) {
    %c0_i32 = arith.constant 0 : i32
    %c0_i32_0 = arith.constant 0 : i32
    %c0_i32_1 = arith.constant 0 : i32
    return %arg0, %c0_i32, %c0_i32_0 : i32, i32, i32
  }
  func.func @transform_1(%arg0: i32) -> (i32, i32, i32) {
    %c0_i32 = arith.constant 0 : i32
    %c0_i32_0 = arith.constant 0 : i32
    %c0_i32_1 = arith.constant 0 : i32
    return %arg0, %c0_i32, %c0_i32_0 : i32, i32, i32
  }
}

</mosaic_0001>

<llo_original>
// kernel: tpu_custom_call.1
$region0: #{tpu_custom_call.1}
  #allocation0 [shape = 'u32[]', space=smem, size = 0x4, offset = 0x4, fixed_abs, tag = 'smem constant byte address 0x4 - core index']
  #allocation1 [shape = 'u32[72,128]{1,0:T(1,128)}', space=vmem, size = 0x9000, scoped, tag = 'internal scratch']
  %s0 = inlined_call_operand.vmem [shape: f32[6,118,8], index: 0, kind: input, shape index: {}]
  %s1 = inlined_call_operand.vmem [shape: f32[6,118,16], index: 1, kind: output, shape index: {}]
  %s2 = sld [smem:[#allocation0]]
  $region37: #{tpu_custom_call.1} parent=0
    _
  %s4 = ssub.s32 1, %s2
  %s5 = scalar_select 0, %s4, %s2
  loop: start=0, step=1, limit=4
  $region2: #{tpu_custom_call.1} parent=0 // loop_pre_header
    _
  $region3: #{tpu_custom_call.1} parent=0 // loop_header
    %s7 = sphi 0, %s11
    %p8 = scmp.ge.s32.totalorder %s7, 4
    %s17 = sphi 0, %s19
    %s20 = sphi 0, %s17
    %s21 = sphi 0, %s20
    %s37 = sphi 0, %s21
    %s43 = sphi 0, %s45
    %s46 = sphi 0, %s43
    %s47 = sphi 0, %s46
    %s63 = sphi 0, %s47
  $region4: #{tpu_custom_call.1} parent=0 // loop_header_branch
    %10 = sbr.rel (%p8) target = $region8
  $region5: #{tpu_custom_call.1} parent=0 // loop_body
    %s12 = ssub.s32 %s7, 1
    %s13 = ssub.s32 %s7, 2
    %s14 = sadd.s32 %s7, 1
    %s15 = ssub.s32 %s7, %s14
    %p16 = scmp.eq.s32.totalorder %s15, 0
    %s18 = sadd.s32 %s17, 1
    %s19 = scalar_select %p16, %s17, %s18
    %p22 = pneg %p16
    %p23 = scmp.eq.s32.totalorder %s7, 1
    %p24 = por %p22, %p23
    %p25 = scmp.ne.s32.totalorder %s17, %s20
    %p26 = scmp.eq.s32.totalorder %s7, 0
    %p27 = por %p25, %p26
    %p28 = scmp.ne.s32.totalorder %s17, %s20
    %p29 = scmp.eq.s32.totalorder %s12, 1
    %p30 = por %p28, %p29
    %p31 = scmp.ne.s32.totalorder %s20, %s21
    %p32 = scmp.eq.s32.totalorder %s12, 0
    %p33 = por %p31, %p32
    %p34 = scmp.ne.s32.totalorder %s20, %s21
    %p35 = scmp.eq.s32.totalorder %s13, 1
    %p36 = por %p34, %p35
    %p38 = scmp.ne.s32.totalorder %s21, %s37
    %p39 = scmp.eq.s32.totalorder %s13, 0
    %p40 = por %p38, %p39
    %s41 = ssub.s32 %s7, %s14
    %p42 = scmp.eq.s32.totalorder %s41, 0
    %s44 = sadd.s32 %s43, 1
    %s45 = scalar_select %p42, %s43, %s44
    %p48 = pneg %p42
    %p49 = scmp.eq.s32.totalorder %s7, 1
    %p50 = por %p48, %p49
    %p51 = scmp.ne.s32.totalorder %s43, %s46
    %p52 = scmp.eq.s32.totalorder %s7, 0
    %p53 = por %p51, %p52
    %p54 = scmp.ne.s32.totalorder %s43, %s46
    %p55 = scmp.eq.s32.totalorder %s12, 1
    %p56 = por %p54, %p55
    %p57 = scmp.ne.s32.totalorder %s46, %s47
    %p58 = scmp.eq.s32.totalorder %s12, 0
    %p59 = por %p57, %p58
    %p60 = scmp.ne.s32.totalorder %s46, %s47
    %p61 = scmp.eq.s32.totalorder %s13, 1
    %p62 = por %p60, %p61
    %p64 = scmp.ne.s32.totalorder %s47, %s63
    %p65 = scmp.eq.s32.totalorder %s13, 0
    %p66 = por %p64, %p65
    %p67 = scmp.le.s32.totalorder 1, %s7
    %p68 = scmp.lt.s32.totalorder %s7, 3
    %p69 = pnand %p67, %p68
    %p70 = pneg %p69
    // Predicated region
    $region9: #{tpu_custom_call.1} parent=5 // pred_check
      _
    $region10: #{tpu_custom_call.1} parent=5 // pred_check_branch
      %72 = sbr.rel (%p69) target = $region12
    $region11: #{tpu_custom_call.1} parent=5 // pred_region
      %s73 = ssub.s32 %s7, 1
    $region12: #{tpu_custom_call.1} parent=5 // pred_fallthru
      _
    %p74 = scmp.lt.s32.totalorder %s7, 2
    // Predicated region
    $region13: #{tpu_custom_call.1} parent=5 // pred_check
      %p75 = pneg %p74
    $region14: #{tpu_custom_call.1} parent=5 // pred_check_branch
      %77 = sbr.rel (%p75) target = $region16
    $region15: #{tpu_custom_call.1} parent=5 // pred_region
      // Predicated region
      $region17: #{tpu_custom_call.1} parent=15 // pred_check
        %p78 = pneg %p27
      $region18: #{tpu_custom_call.1} parent=15 // pred_check_branch
        %80 = sbr.rel (%p78) target = $region20
      $region19: #{tpu_custom_call.1} parent=15 // pred_region
        %s81 = smul.u32 3, %s7
        %p82 = scmp.lt.s32.totalorder %s81, 5
        %s83 = scalar_select %p82, %s81, 5
        %s84 = smul.addr %s83, 15
        %s85 = smul.addr %s84, 8
        %s86 = scalar_lea.vmem %s0, %s85
        %s87 = smul.u32 3, %s7
      $region20: #{tpu_custom_call.1} parent=15 // pred_fallthru
        _
    $region16: #{tpu_custom_call.1} parent=5 // pred_fallthru
      _
    %p88 = scmp.le.s32.totalorder 1, %s7
    %p89 = scmp.lt.s32.totalorder %s7, 3
    %p90 = pnand %p88, %p89
    %p91 = pneg %p90
    // Predicated region
    $region21: #{tpu_custom_call.1} parent=5 // pred_check
      _
    $region22: #{tpu_custom_call.1} parent=5 // pred_check_branch
      %93 = sbr.rel (%p90) target = $region24
    $region23: #{tpu_custom_call.1} parent=5 // pred_region
      %s94 = ssub.s32 %s7, 1
      %s95 = smul.u32 3, %s12
      %p96 = scmp.lt.s32.totalorder %s95, 5
      %s97 = scalar_select %p96, %s95, 5
      %s98 = smul.addr %s97, 15
      %s99 = smul.addr %s98, 8
      %s100 = scalar_lea.vmem %s0, %s99
      %p101 = pneg %p33
      %p102 = pneg %p30
      %p103 = pneg %p59
      %p104 = pneg %p56
      %s105 = smul.u32 3, %s12
      %p106 = scmp.lt.s32.totalorder %s105, 5
      %s107 = scalar_select %p106, %s105, 5
      %s108 = smul.addr %s107, 15
      %s109 = smul.addr %s108, 8
      %s110 = scalar_lea.vmem %s1, %s109
      %s111 = smul.u32 3, %s12
      %p112 = scmp.lt.s32.totalorder %s111, 5
      %s113 = scalar_select %p112, %s111, 5
      %s114 = smul.addr %s113, 15
      %s115 = smul.addr %s114, 8
      %s116 = scalar_lea.vmem %s0, %s115
      %s117 = smul.u32 3, %s12
      %s118 = smul.u32 3, %s12
      %p119 = scmp.lt.s32.totalorder %s118, 5
      %s120 = scalar_select %p119, %s118, 5
      %s121 = smul.addr %s120, 15
      %s122 = smul.addr %s121, 8
      %s123 = scalar_lea.vmem %s1, %s122
      %s124 = smul.u32 3, %s12
      %v125 = vld [vmem:[%s116] sm:$0xff]
      %v126 = vld [vmem:[%s116 + $0x8] sm:$0xff]
      %v127 = vld [vmem:[%s116 + $0x10] sm:$0xff]
      %v128 = vld [vmem:[%s116 + $0x18] sm:$0xff]
      %v129 = vld [vmem:[%s116 + $0x20] sm:$0xff]
      %v130 = vld [vmem:[%s116 + $0x28] sm:$0xff]
      %v131 = vld [vmem:[%s116 + $0x30] sm:$0xff]
      %v132 = vld [vmem:[%s116 + $0x38] sm:$0xff]
      %v133 = vld [vmem:[%s116 + $0x40] sm:$0xff]
      %v134 = vld [vmem:[%s116 + $0x48] sm:$0xff]
      %v135 = vld [vmem:[%s116 + $0x50] sm:$0xff]
      %v136 = vld [vmem:[%s116 + $0x58] sm:$0xff]
      %v137 = vld [vmem:[%s116 + $0x60] sm:$0xff]
      %v138 = vld [vmem:[%s116 + $0x68] sm:$0xff]
      %v139 = vld [vmem:[%s116 + $0x70] sm:$0x3f]
      %v140 = vld [vmem:[%s116 + $0x78] sm:$0xff]
      %v141 = vld [vmem:[%s116 + $0x80] sm:$0xff]
      %v142 = vld [vmem:[%s116 + $0x88] sm:$0xff]
      %v143 = vld [vmem:[%s116 + $0x90] sm:$0xff]
      %v144 = vld [vmem:[%s116 + $0x98] sm:$0xff]
      %v145 = vld [vmem:[%s116 + $0xa0] sm:$0xff]
      %v146 = vld [vmem:[%s116 + $0xa8] sm:$0xff]
      %v147 = vld [vmem:[%s116 + $0xb0] sm:$0xff]
      %v148 = vld [vmem:[%s116 + $0xb8] sm:$0xff]
      %v149 = vld [vmem:[%s116 + $0xc0] sm:$0xff]
      %v150 = vld [vmem:[%s116 + $0xc8] sm:$0xff]
      %v151 = vld [vmem:[%s116 + $0xd0] sm:$0xff]
      %v152 = vld [vmem:[%s116 + $0xd8] sm:$0xff]
      %v153 = vld [vmem:[%s116 + $0xe0] sm:$0xff]
      %v154 = vld [vmem:[%s116 + $0xe8] sm:$0x3f]
      %v155 = vld [vmem:[%s116 + $0xf0] sm:$0xff]
      %v156 = vld [vmem:[%s116 + $0xf8] sm:$0xff]
      %v157 = vld [vmem:[%s116 + $0x100] sm:$0xff]
      %v158 = vld [vmem:[%s116 + $0x108] sm:$0xff]
      %v159 = vld [vmem:[%s116 + $0x110] sm:$0xff]
      %v160 = vld [vmem:[%s116 + $0x118] sm:$0xff]
      %v161 = vld [vmem:[%s116 + $0x120] sm:$0xff]
      %v162 = vld [vmem:[%s116 + $0x128] sm:$0xff]
      %v163 = vld [vmem:[%s116 + $0x130] sm:$0xff]
      %v164 = vld [vmem:[%s116 + $0x138] sm:$0xff]
      %v165 = vld [vmem:[%s116 + $0x140] sm:$0xff]
      %v166 = vld [vmem:[%s116 + $0x148] sm:$0xff]
      %v167 = vld [vmem:[%s116 + $0x150] sm:$0xff]
      %v168 = vld [vmem:[%s116 + $0x158] sm:$0xff]
      %v169 = vld [vmem:[%s116 + $0x160] sm:$0x3f]
      %vm170 = vcmask 64512
      %v171 = vsel %vm170, %v125, 0.0
      %v172 = vsel %vm170, %v126, 0.0
      %v173 = vadd.f32 %v171, %v172
      %v174 = vsel %vm170, %v127, 0.0
      %v175 = vadd.f32 %v173, %v174
      %v176 = vsel %vm170, %v128, 0.0
      %v177 = vadd.f32 %v175, %v176
      %v178 = vsel %vm170, %v129, 0.0
      %v179 = vadd.f32 %v177, %v178
      %v180 = vsel %vm170, %v130, 0.0
      %v181 = vadd.f32 %v179, %v180
      %v182 = vsel %vm170, %v131, 0.0
      %v183 = vadd.f32 %v181, %v182
      %v184 = vsel %vm170, %v132, 0.0
      %v185 = vadd.f32 %v183, %v184
      %v186 = vsel %vm170, %v133, 0.0
      %v187 = vadd.f32 %v185, %v186
      %v188 = vsel %vm170, %v134, 0.0
      %v189 = vadd.f32 %v187, %v188
      %v190 = vsel %vm170, %v135, 0.0
      %v191 = vadd.f32 %v189, %v190
      %v192 = vsel %vm170, %v136, 0.0
      %v193 = vadd.f32 %v191, %v192
      %v194 = vsel %vm170, %v137, 0.0
      %v195 = vadd.f32 %v193, %v194
      %v196 = vsel %vm170, %v138, 0.0
      %v197 = vadd.f32 %v195, %v196
      %vm198 = vcmask 62464
      %v199 = vsel %vm198, %v139, 0.0
      %v200 = vadd.f32 %v197, %v199
      %v201 = vrot.slane %v200, 4
      %v202 = vadd.f32 %v200, %v201
      %v203 = vrot.slane %v202, 2
      %v204 = vadd.f32 %v202, %v203
      %v205 = vrot.slane %v204, 1
      %v206 = vadd.f32 %v204, %v205
      %v207 = vsel %vm170, %v140, 0.0
      %v208 = vsel %vm170, %v141, 0.0
      %v209 = vadd.f32 %v207, %v208
      %v210 = vsel %vm170, %v142, 0.0
      %v211 = vadd.f32 %v209, %v210
      %v212 = vsel %vm170, %v143, 0.0
      %v213 = vadd.f32 %v211, %v212
      %v214 = vsel %vm170, %v144, 0.0
      %v215 = vadd.f32 %v213, %v214
      %v216 = vsel %vm170, %v145, 0.0
      %v217 = vadd.f32 %v215, %v216
      %v218 = vsel %vm170, %v146, 0.0
      %v219 = vadd.f32 %v217, %v218
      %v220 = vsel %vm170, %v147, 0.0
      %v221 = vadd.f32 %v219, %v220
      %v222 = vsel %vm170, %v148, 0.0
      %v223 = vadd.f32 %v221, %v222
      %v224 = vsel %vm170, %v149, 0.0
      %v225 = vadd.f32 %v223, %v224
      %v226 = vsel %vm170, %v150, 0.0
      %v227 = vadd.f32 %v225, %v226
      %v228 = vsel %vm170, %v151, 0.0
      %v229 = vadd.f32 %v227, %v228
      %v230 = vsel %vm170, %v152, 0.0
      %v231 = vadd.f32 %v229, %v230
      %v232 = vsel %vm170, %v153, 0.0
      %v233 = vadd.f32 %v231, %v232
      %v234 = vsel %vm198, %v154, 0.0
      %v235 = vadd.f32 %v233, %v234
      %v236 = vrot.slane %v235, 4
      %v237 = vadd.f32 %v235, %v236
      %v238 = vrot.slane %v237, 2
      %v239 = vadd.f32 %v237, %v238
      %v240 = vrot.slane %v239, 1
      %v241 = vadd.f32 %v239, %v240
      %v242 = vsel %vm170, %v155, 0.0
      %v243 = vsel %vm170, %v156, 0.0
      %v244 = vadd.f32 %v242, %v243
      %v245 = vsel %vm170, %v157, 0.0
      %v246 = vadd.f32 %v244, %v245
      %v247 = vsel %vm170, %v158, 0.0
      %v248 = vadd.f32 %v246, %v247
      %v249 = vsel %vm170, %v159, 0.0
      %v250 = vadd.f32 %v248, %v249
      %v251 = vsel %vm170, %v160, 0.0
      %v252 = vadd.f32 %v250, %v251
      %v253 = vsel %vm170, %v161, 0.0
      %v254 = vadd.f32 %v252, %v253
      %v255 = vsel %vm170, %v162, 0.0
      %v256 = vadd.f32 %v254, %v255
      %v257 = vsel %vm170, %v163, 0.0
      %v258 = vadd.f32 %v256, %v257
      %v259 = vsel %vm170, %v164, 0.0
      %v260 = vadd.f32 %v258, %v259
      %v261 = vsel %vm170, %v165, 0.0
      %v262 = vadd.f32 %v260, %v261
      %v263 = vsel %vm170, %v166, 0.0
      %v264 = vadd.f32 %v262, %v263
      %v265 = vsel %vm170, %v167, 0.0
      %v266 = vadd.f32 %v264, %v265
      %v267 = vsel %vm170, %v168, 0.0
      %v268 = vadd.f32 %v266, %v267
      %v269 = vsel %vm198, %v169, 0.0
      %v270 = vadd.f32 %v268, %v269
      %v271 = vrot.slane %v270, 4
      %v272 = vadd.f32 %v270, %v271
      %v273 = vrot.slane %v272, 2
      %v274 = vadd.f32 %v272, %v273
      %v275 = vrot.slane %v274, 1
      %v276 = vadd.f32 %v274, %v275
      %v277 = vmul.f32 %v206, 0.008474576
      %v278 = vmul.f32 %v241, 0.008474576
      %v279 = vmul.f32 %v276, 0.008474576
      %283 = vrot.lane.b32.xlu0 %v277, 8
      %v284 = vpop.permute.xlu0 %283
      %285 = vrot.lane.b32.xlu0 %v278, 8
      %v286 = vpop.permute.xlu0 %285
      %287 = vrot.lane.b32.xlu0 %v279, 8
      %v288 = vpop.permute.xlu0 %287
      %v292 = vsel %vm170, %v125, %v284
      %v293 = vsel %vm170, %v126, %v284
      %v294 = vsel %vm170, %v127, %v284
      %v295 = vsel %vm170, %v128, %v284
      %v296 = vsel %vm170, %v129, %v284
      %v297 = vsel %vm170, %v130, %v284
      %v298 = vsel %vm170, %v131, %v284
      %v299 = vsel %vm170, %v132, %v284
      %v300 = vsel %vm170, %v133, %v284
      %v301 = vsel %vm170, %v134, %v284
      %v302 = vsel %vm170, %v135, %v284
      %v303 = vsel %vm170, %v136, %v284
      %v304 = vsel %vm170, %v137, %v284
      %v305 = vsel %vm170, %v138, %v284
      %v306 = vsel %vm170, %v139, %v284
      %v307 = vsel %vm170, %v140, %v286
      %v308 = vsel %vm170, %v141, %v286
      %v309 = vsel %vm170, %v142, %v286
      %v310 = vsel %vm170, %v143, %v286
      %v311 = vsel %vm170, %v144, %v286
      %v312 = vsel %vm170, %v145, %v286
      %v313 = vsel %vm170, %v146, %v286
      %v314 = vsel %vm170, %v147, %v286
      %v315 = vsel %vm170, %v148, %v286
      %v316 = vsel %vm170, %v149, %v286
      %v317 = vsel %vm170, %v150, %v286
      %v318 = vsel %vm170, %v151, %v286
      %v319 = vsel %vm170, %v152, %v286
      %v320 = vsel %vm170, %v153, %v286
      %v321 = vsel %vm170, %v154, %v286
      %v322 = vsel %vm170, %v155, %v288
      %v323 = vsel %vm170, %v156, %v288
      %v324 = vsel %vm170, %v157, %v288
      %v325 = vsel %vm170, %v158, %v288
      %v326 = vsel %vm170, %v159, %v288
      %v327 = vsel %vm170, %v160, %v288
      %v328 = vsel %vm170, %v161, %v288
      %v329 = vsel %vm170, %v162, %v288
      %v330 = vsel %vm170, %v163, %v288
      %v331 = vsel %vm170, %v164, %v288
      %v332 = vsel %vm170, %v165, %v288
      %v333 = vsel %vm170, %v166, %v288
      %v334 = vsel %vm170, %v167, %v288
      %v335 = vsel %vm170, %v168, %v288
      %v336 = vsel %vm170, %v169, %v288
      %vm337 = vcmask 130048
      %338 = vst.msk [vmem:[%s123] sm:$0xff] %vm337, %v292
      %339 = vst.msk [vmem:[%s123 + $0x8] sm:$0xff] %vm337, %v293
      %340 = vst.msk [vmem:[%s123 + $0x10] sm:$0xff] %vm337, %v294
      %341 = vst.msk [vmem:[%s123 + $0x18] sm:$0xff] %vm337, %v295
      %342 = vst.msk [vmem:[%s123 + $0x20] sm:$0xff] %vm337, %v296
      %343 = vst.msk [vmem:[%s123 + $0x28] sm:$0xff] %vm337, %v297
      %344 = vst.msk [vmem:[%s123 + $0x30] sm:$0xff] %vm337, %v298
      %345 = vst.msk [vmem:[%s123 + $0x38] sm:$0xff] %vm337, %v299
      %346 = vst.msk [vmem:[%s123 + $0x40] sm:$0xff] %vm337, %v300
      %347 = vst.msk [vmem:[%s123 + $0x48] sm:$0xff] %vm337, %v301
      %348 = vst.msk [vmem:[%s123 + $0x50] sm:$0xff] %vm337, %v302
      %349 = vst.msk [vmem:[%s123 + $0x58] sm:$0xff] %vm337, %v303
      %350 = vst.msk [vmem:[%s123 + $0x60] sm:$0xff] %vm337, %v304
      %351 = vst.msk [vmem:[%s123 + $0x68] sm:$0xff] %vm337, %v305
      %vm352 = vcmask 128000
      %353 = vst.msk [vmem:[%s123 + $0x70] sm:$0x3f] %vm352, %v306
      %354 = vst.msk [vmem:[%s123 + $0x78] sm:$0xff] %vm337, %v307
      %355 = vst.msk [vmem:[%s123 + $0x80] sm:$0xff] %vm337, %v308
      %356 = vst.msk [vmem:[%s123 + $0x88] sm:$0xff] %vm337, %v309
      %357 = vst.msk [vmem:[%s123 + $0x90] sm:$0xff] %vm337, %v310
      %358 = vst.msk [vmem:[%s123 + $0x98] sm:$0xff] %vm337, %v311
      %359 = vst.msk [vmem:[%s123 + $0xa0] sm:$0xff] %vm337, %v312
      %360 = vst.msk [vmem:[%s123 + $0xa8] sm:$0xff] %vm337, %v313
      %361 = vst.msk [vmem:[%s123 + $0xb0] sm:$0xff] %vm337, %v314
      %362 = vst.msk [vmem:[%s123 + $0xb8] sm:$0xff] %vm337, %v315
      %363 = vst.msk [vmem:[%s123 + $0xc0] sm:$0xff] %vm337, %v316
      %364 = vst.msk [vmem:[%s123 + $0xc8] sm:$0xff] %vm337, %v317
      %365 = vst.msk [vmem:[%s123 + $0xd0] sm:$0xff] %vm337, %v318
      %366 = vst.msk [vmem:[%s123 + $0xd8] sm:$0xff] %vm337, %v319
      %367 = vst.msk [vmem:[%s123 + $0xe0] sm:$0xff] %vm337, %v320
      %368 = vst.msk [vmem:[%s123 + $0xe8] sm:$0x3f] %vm352, %v321
      %369 = vst.msk [vmem:[%s123 + $0xf0] sm:$0xff] %vm337, %v322
      %370 = vst.msk [vmem:[%s123 + $0xf8] sm:$0xff] %vm337, %v323
      %371 = vst.msk [vmem:[%s123 + $0x100] sm:$0xff] %vm337, %v324
      %372 = vst.msk [vmem:[%s123 + $0x108] sm:$0xff] %vm337, %v325
      %373 = vst.msk [vmem:[%s123 + $0x110] sm:$0xff] %vm337, %v326
      %374 = vst.msk [vmem:[%s123 + $0x118] sm:$0xff] %vm337, %v327
      %375 = vst.msk [vmem:[%s123 + $0x120] sm:$0xff] %vm337, %v328
      %376 = vst.msk [vmem:[%s123 + $0x128] sm:$0xff] %vm337, %v329
      %377 = vst.msk [vmem:[%s123 + $0x130] sm:$0xff] %vm337, %v330
      %378 = vst.msk [vmem:[%s123 + $0x138] sm:$0xff] %vm337, %v331
      %379 = vst.msk [vmem:[%s123 + $0x140] sm:$0xff] %vm337, %v332
      %380 = vst.msk [vmem:[%s123 + $0x148] sm:$0xff] %vm337, %v333
      %381 = vst.msk [vmem:[%s123 + $0x150] sm:$0xff] %vm337, %v334
      %382 = vst.msk [vmem:[%s123 + $0x158] sm:$0xff] %vm337, %v335
      %383 = vst.msk [vmem:[%s123 + $0x160] sm:$0x3f] %vm352, %v336
      %s384 = smul.u32 3, %s12
      %p385 = scmp.lt.s32.totalorder %s384, 5
      %s386 = scalar_select %p385, %s384, 5
      %s387 = smul.addr %s386, 15
      %s388 = smul.addr %s387, 8
      %s389 = scalar_lea.vmem %s1, %s388
      // Predicated region
      $region25: #{tpu_custom_call.1} parent=23 // pred_check
        %p390 = pneg %p56
      $region26: #{tpu_custom_call.1} parent=23 // pred_check_branch
        %392 = sbr.rel (%p390) target = $region28
      $region27: #{tpu_custom_call.1} parent=23 // pred_region
        %s393 = smul.u32 3, %s12
      $region28: #{tpu_custom_call.1} parent=23 // pred_fallthru
        _
    $region24: #{tpu_custom_call.1} parent=5 // pred_fallthru
      _
    %p394 = scmp.le.s32.totalorder 2, %s7
    // Predicated region
    $region29: #{tpu_custom_call.1} parent=5 // pred_check
      %p395 = pneg %p394
    $region30: #{tpu_custom_call.1} parent=5 // pred_check_branch
      %397 = sbr.rel (%p395) target = $region32
    $region31: #{tpu_custom_call.1} parent=5 // pred_region
      %s398 = ssub.s32 %s7, 2
      // Predicated region
      $region33: #{tpu_custom_call.1} parent=31 // pred_check
        %p399 = pneg %p62
      $region34: #{tpu_custom_call.1} parent=31 // pred_check_branch
        %401 = sbr.rel (%p399) target = $region36
      $region35: #{tpu_custom_call.1} parent=31 // pred_region
        %s402 = smul.u32 3, %s13
        %p403 = scmp.lt.s32.totalorder %s402, 5
        %s404 = scalar_select %p403, %s402, 5
        %s405 = smul.addr %s404, 15
        %s406 = smul.addr %s405, 8
        %s407 = scalar_lea.vmem %s1, %s406
      $region36: #{tpu_custom_call.1} parent=31 // pred_fallthru
        _
    $region32: #{tpu_custom_call.1} parent=5 // pred_fallthru
      _
  $region6: #{tpu_custom_call.1} parent=0 // loop_footer
    %s11 = sadd.s32 1, %s7
  $region7: #{tpu_custom_call.1} parent=0 // loop_footer_branch
    %6 = sbr.rel target = $region3
  $region8: #{tpu_custom_call.1} parent=0 // loop_exit
    _

</llo_original>
